<compile_context>
chip_gen: v7x
topology: tpu7x:2x2x1
jax: 0.10.0
libtpu: 0.0.40
codegen_flags: <defaults>
</compile_context>

<pallas_src>
import jax
import jax.numpy as jnp
from jax.experimental import pallas as pl
from jax.experimental.pallas import tpu as pltpu

_OUT_PAD = 128  # lane-dense width for the fc3 output (real Q lives in column 0)


def critic_kernel(x_ref, w1_ref, b1_ref, w2_ref, b2_ref, w3_ref, b3_ref, o_ref):
    bf16 = jnp.bfloat16
    # fc1: single MXU pass over the pre-concatenated [state, action] rows.
    h1 = jnp.dot(x_ref[...].astype(bf16), w1_ref[...],
                 preferred_element_type=jnp.float32)
    h1 = jnp.maximum(h1 + b1_ref[...], 0.0)                      # relu(fc1), f32
    # fc2
    h2 = jnp.dot(h1.astype(bf16), w2_ref[...],
                 preferred_element_type=jnp.float32)
    h2 = jnp.maximum(h2 + b2_ref[...], 0.0)                      # relu(fc2), f32
    # fc3, lane-dense: W3 is zero-padded to 128 output lanes so this is an
    # unmasked (tm, 128) store.  b3 (SMEM scalar) is added to every lane, so
    # the padded lanes hold b3 (NOT zero); only column 0 is the real Q value
    # and only column 0 is read back outside the kernel.
    q = jnp.dot(h2.astype(bf16), w3_ref[...],
                preferred_element_type=jnp.float32)
    o_ref[...] = q + b3_ref[0, 0]


def _pick_batch_tile(batch):
    # Per-grid-step overhead is ~0.35 us (~600 cycles) while a 64-256 row tile
    # of this network is only tens of ns of MXU work, so never split small
    # batches: one full-batch tile, grid=(1,).  Only split once each tile can
    # be a full MXU-native 256 rows (>= 2 tiles at batch >= 512), which also
    # amortizes the per-layer RHS weight pushes over 256 LHS rows and gives
    # v7x's two TensorCores real per-core work.  VMEM is never the constraint
    # here (~200 KB of bf16 weights + <1 MB activations even at tm=512).
    if batch >= 512 and batch % 256 == 0:
        return 256
    return batch


def critic_forward(state, action, params):
    """Pallas-fused forward: fc3(relu(fc2(relu(fc1(cat[state, action])))))."""
    w1, b1, w2, b2, w3p, b3 = params
    batch = state.shape[0]
    sa_dim = w1.shape[0]
    hidden = w2.shape[0]

    # Tiny (batch x sa_dim x 4B) concat in XLA; lets fc1 run as one MXU pass
    # instead of two tiny-K passes inside the kernel.
    x = jnp.concatenate([state, action], axis=1).astype(jnp.float32)

    tm = _pick_batch_tile(batch)
    grid = (batch // tm,)

    row_map = lambda i: (i, 0)      # batch-tiled operands
    full_map = lambda i: (0, 0)     # weights/biases: fully resident, reused

    flops = 2 * batch * (sa_dim * hidden + hidden * hidden + hidden * _OUT_PAD)
    bytes_accessed = (x.size * 4
                      + (w1.size + w2.size + w3p.size) * 2
                      + (b1.size + b2.size + b3.size) * 4
                      + batch * _OUT_PAD * 4)

    q_wide = pl.pallas_call(
        critic_kernel,
        out_shape=jax.ShapeDtypeStruct((batch, _OUT_PAD), jnp.float32),
        grid=grid,
        in_specs=[
            pl.BlockSpec((tm, sa_dim), row_map),
            pl.BlockSpec((sa_dim, hidden), full_map),
            pl.BlockSpec((1, hidden), full_map),
            pl.BlockSpec((hidden, hidden), full_map),
            pl.BlockSpec((1, hidden), full_map),
            pl.BlockSpec((hidden, _OUT_PAD), full_map),
            pl.BlockSpec((1, 1), full_map, memory_space=pltpu.MemorySpace.SMEM),
        ],
        out_specs=pl.BlockSpec((tm, _OUT_PAD), row_map),
        compiler_params=pltpu.CompilerParams(
            dimension_semantics=("parallel",)),
        cost_estimate=pl.CostEstimate(
            flops=flops, transcendentals=0, bytes_accessed=bytes_accessed),
    )(x, w1, b1, w2, b2, w3p, b3)

    # Only column 0 is the real Q value (padded lanes hold b3, never read).
    return q_wide[:, :1]


def init_critic_params(key, state_dim, action_dim, hidden=256):
    """nn.Linear default init U(-1/sqrt(fan_in), +1/sqrt(fan_in)).
    Weights are stored transposed to (in, out) and in bf16 (MXU-native);
    biases stay f32.  fc1's weight is kept row-stacked (state rows then action
    rows) so the kernel runs fc1 as one MXU pass over cat[state, action];
    fc3 is zero-padded to 128 output lanes (lane-dense store) and its bias is
    a (1,1) scalar destined for SMEM."""
    def linear(k, fan_in, fan_out):
        kw, kb = jax.random.split(k)
        bound = fan_in ** -0.5
        w = jax.random.uniform(kw, (fan_in, fan_out), jnp.float32, -bound, bound)
        b = jax.random.uniform(kb, (1, fan_out), jnp.float32, -bound, bound)
        return w, b

    k1, k2, k3 = jax.random.split(key, 3)
    w1, b1 = linear(k1, state_dim + action_dim, hidden)
    w2, b2 = linear(k2, hidden, hidden)
    w3, b3 = linear(k3, hidden, 1)

    w3p = jnp.zeros((hidden, _OUT_PAD), jnp.float32).at[:, :1].set(w3)
    b3s = b3.reshape(1, 1)  # scalar bias for SMEM
    return (w1.astype(jnp.bfloat16), b1,
            w2.astype(jnp.bfloat16), b2,
            w3p.astype(jnp.bfloat16), b3s)


def critic_forward_ref(state, action, params):
    """Pure-JAX reference mirroring the kernel numerics
    (bf16 matmul operands, f32 accumulation / bias / ReLU).
    Note: ~1e-3 relative divergence from a pure-f32 PyTorch CriticNetwork is
    expected from the bf16 MXU operands."""
    w1, b1, w2, b2, w3p, b3 = params
    bf16 = jnp.bfloat16
    x = jnp.concatenate([state, action], axis=1)
    h1 = jnp.maximum(
        jnp.dot(x.astype(bf16), w1, preferred_element_type=jnp.float32) + b1, 0.0)
    h2 = jnp.maximum(
        jnp.dot(h1.astype(bf16), w2, preferred_element_type=jnp.float32) + b2, 0.0)
    q = jnp.dot(h2.astype(bf16), w3p, preferred_element_type=jnp.float32) + b3[0, 0]
    return q[:, :1]


if __name__ == "__main__":
    # Module-consistent shapes: hidden=256 (fixed by the module), small
    # state/action dims, and a realistic DDPG minibatch (runs as grid=(1,)).
    state_dim, action_dim, batch = 16, 8, 128

    key = jax.random.PRNGKey(0)
    k_params, k_state, k_action = jax.random.split(key, 3)

    params = init_critic_params(k_params, state_dim, action_dim)
    state = jax.random.normal(k_state, (batch, state_dim), jnp.float32)
    action = jax.random.normal(k_action, (batch, action_dim), jnp.float32)

    q = jax.block_until_ready(critic_forward(state, action, params))
    q_ref = critic_forward_ref(state, action, params)

    assert q.shape == (batch, 1), q.shape
    assert jnp.allclose(q, q_ref, atol=1e-3, rtol=1e-3), "mismatch vs JAX reference"
    print("KERNEL_OK")
</pallas_src>

<mosaic_0001>
module attributes {stable_mosaic.version = 11 : i64} {
  func.func @critic_kernel(%arg0: i32, %arg1: memref<128x24xf32, #tpu.memory_space<vmem>>, %arg2: memref<24x256xbf16, #tpu.memory_space<vmem>>, %arg3: memref<1x256xf32, #tpu.memory_space<vmem>>, %arg4: memref<256x256xbf16, #tpu.memory_space<vmem>>, %arg5: memref<1x256xf32, #tpu.memory_space<vmem>>, %arg6: memref<256x128xbf16, #tpu.memory_space<vmem>>, %arg7: memref<1x1xf32, #tpu.memory_space<smem>>, %arg8: memref<128x128xf32, #tpu.memory_space<vmem>>) attributes {dimension_semantics = [#tpu.dimension_semantics<parallel>], iteration_bounds = array<i64: 1>, scalar_prefetch = 0 : i64, scratch_operands = 0 : i64, tpu.core_type = #tpu.core_type<tc>, window_params = [{transform_indices = @transform_0, window_bounds = array<i64: 128, 24>}, {pipeline_mode = #tpu.pipeline_mode<synchronous>, transform_indices = @transform_1, window_bounds = array<i64: 24, 256>}, {pipeline_mode = #tpu.pipeline_mode<synchronous>, transform_indices = @transform_2, window_bounds = array<i64: 1, 256>}, {pipeline_mode = #tpu.pipeline_mode<synchronous>, transform_indices = @transform_3, window_bounds = array<i64: 256, 256>}, {pipeline_mode = #tpu.pipeline_mode<synchronous>, transform_indices = @transform_4, window_bounds = array<i64: 1, 256>}, {pipeline_mode = #tpu.pipeline_mode<synchronous>, transform_indices = @transform_5, window_bounds = array<i64: 256, 128>}, {transform_indices = @transform_6, window_bounds = array<i64: 1, 1>}, {transform_indices = @transform_7, window_bounds = array<i64: 128, 128>}]} {
    %c0 = arith.constant 0 : index
    %c0_0 = arith.constant 0 : index
    %0 = vector.load %arg1[%c0, %c0_0] : memref<128x24xf32, #tpu.memory_space<vmem>>, vector<128x24xf32>
    %1 = arith.truncf %0 : vector<128x24xf32> to vector<128x24xbf16>
    %c0_1 = arith.constant 0 : index
    %c0_2 = arith.constant 0 : index
    %2 = vector.load %arg2[%c0_1, %c0_2] : memref<24x256xbf16, #tpu.memory_space<vmem>>, vector<24x256xbf16>
    %cst = arith.constant dense<0.000000e+00> : vector<128x256xf32>
    %3 = tpu.matmul %1, %2, %cst {dimension_numbers = #tpu.dot_dimension_numbers<[1], [0], [0], [1], [0, 0, 1, 1], [], []>} : vector<128x24xbf16>, vector<24x256xbf16>, vector<128x256xf32> -> vector<128x256xf32>
    %c0_3 = arith.constant 0 : index
    %c0_4 = arith.constant 0 : index
    %4 = vector.load %arg3[%c0_3, %c0_4] : memref<1x256xf32, #tpu.memory_space<vmem>>, vector<1x256xf32>
    %5 = vector.broadcast %4 : vector<1x256xf32> to vector<128x256xf32>
    %6 = arith.addf %3, %5 : vector<128x256xf32>
    %cst_5 = arith.constant 0.000000e+00 : f32
    %7 = vector.broadcast %cst_5 : f32 to vector<128x256xf32>
    %8 = arith.maximumf %6, %7 : vector<128x256xf32>
    %9 = arith.truncf %8 : vector<128x256xf32> to vector<128x256xbf16>
    %c0_6 = arith.constant 0 : index
    %c0_7 = arith.constant 0 : index
    %10 = vector.load %arg4[%c0_6, %c0_7] : memref<256x256xbf16, #tpu.memory_space<vmem>>, vector<256x256xbf16>
    %cst_8 = arith.constant dense<0.000000e+00> : vector<128x256xf32>
    %11 = tpu.matmul %9, %10, %cst_8 {dimension_numbers = #tpu.dot_dimension_numbers<[1], [0], [0], [1], [0, 0, 1, 1], [], []>} : vector<128x256xbf16>, vector<256x256xbf16>, vector<128x256xf32> -> vector<128x256xf32>
    %c0_9 = arith.constant 0 : index
    %c0_10 = arith.constant 0 : index
    %12 = vector.load %arg5[%c0_9, %c0_10] : memref<1x256xf32, #tpu.memory_space<vmem>>, vector<1x256xf32>
    %13 = vector.broadcast %12 : vector<1x256xf32> to vector<128x256xf32>
    %14 = arith.addf %11, %13 : vector<128x256xf32>
    %cst_11 = arith.constant 0.000000e+00 : f32
    %15 = vector.broadcast %cst_11 : f32 to vector<128x256xf32>
    %16 = arith.maximumf %14, %15 : vector<128x256xf32>
    %17 = arith.truncf %16 : vector<128x256xf32> to vector<128x256xbf16>
    %c0_12 = arith.constant 0 : index
    %c0_13 = arith.constant 0 : index
    %18 = vector.load %arg6[%c0_12, %c0_13] : memref<256x128xbf16, #tpu.memory_space<vmem>>, vector<256x128xbf16>
    %cst_14 = arith.constant dense<0.000000e+00> : vector<128x128xf32>
    %19 = tpu.matmul %17, %18, %cst_14 {dimension_numbers = #tpu.dot_dimension_numbers<[1], [0], [0], [1], [0, 0, 1, 1], [], []>} : vector<128x256xbf16>, vector<256x128xbf16>, vector<128x128xf32> -> vector<128x128xf32>
    %c0_15 = arith.constant 0 : index
    %c0_16 = arith.constant 0 : index
    %20 = memref.load %arg7[%c0_15, %c0_16] : memref<1x1xf32, #tpu.memory_space<smem>>
    %21 = vector.broadcast %20 : f32 to vector<128x128xf32>
    %22 = arith.addf %19, %21 : vector<128x128xf32>
    %c0_17 = arith.constant 0 : index
    %c0_18 = arith.constant 0 : index
    %23 = vector.load %arg8[%c0_17, %c0_18] : memref<128x128xf32, #tpu.memory_space<vmem>>, vector<128x128xf32>
    tpu.vector_store %arg8[%c0_17, %c0_18], %22 {strides = array<i32>} : memref<128x128xf32, #tpu.memory_space<vmem>>, vector<128x128xf32>,
    return
  }
  func.func @transform_0(%arg0: i32) -> (i32, i32) {
    %c0_i32 = arith.constant 0 : i32
    %c0_i32_0 = arith.constant 0 : i32
    return %arg0, %c0_i32 : i32, i32
  }
  func.func @transform_1(%arg0: i32) -> (i32, i32) {
    %c0_i32 = arith.constant 0 : i32
    %c0_i32_0 = arith.constant 0 : i32
    %c0_i32_1 = arith.constant 0 : i32
    return %c0_i32, %c0_i32_0 : i32, i32
  }
  func.func @transform_2(%arg0: i32) -> (i32, i32) {
    %c0_i32 = arith.constant 0 : i32
    %c0_i32_0 = arith.constant 0 : i32
    %c0_i32_1 = arith.constant 0 : i32
    return %c0_i32, %c0_i32_0 : i32, i32
  }
  func.func @transform_3(%arg0: i32) -> (i32, i32) {
    %c0_i32 = arith.constant 0 : i32
    %c0_i32_0 = arith.constant 0 : i32
    %c0_i32_1 = arith.constant 0 : i32
    return %c0_i32, %c0_i32_0 : i32, i32
  }
  func.func @transform_4(%arg0: i32) -> (i32, i32) {
    %c0_i32 = arith.constant 0 : i32
    %c0_i32_0 = arith.constant 0 : i32
    %c0_i32_1 = arith.constant 0 : i32
    return %c0_i32, %c0_i32_0 : i32, i32
  }
  func.func @transform_5(%arg0: i32) -> (i32, i32) {
    %c0_i32 = arith.constant 0 : i32
    %c0_i32_0 = arith.constant 0 : i32
    %c0_i32_1 = arith.constant 0 : i32
    return %c0_i32, %c0_i32_0 : i32, i32
  }
  func.func @transform_6(%arg0: i32) -> (i32, i32) {
    %c0_i32 = arith.constant 0 : i32
    %c0_i32_0 = arith.constant 0 : i32
    %c0_i32_1 = arith.constant 0 : i32
    return %c0_i32, %c0_i32_0 : i32, i32
  }
  func.func @transform_7(%arg0: i32) -> (i32, i32) {
    %c0_i32 = arith.constant 0 : i32
    %c0_i32_0 = arith.constant 0 : i32
    return %arg0, %c0_i32 : i32, i32
  }
}

</mosaic_0001>

<llo_original>
// kernel: tpu_custom_call.1
$region0: #{tpu_custom_call.1}
  #allocation0 [shape = 'u32[]', space=smem, size = 0x4, offset = 0x4, fixed_abs, tag = 'smem constant byte address 0x4 - core index']
  #allocation1 [shape = 'u32[144,128]{1,0:T(1,128)}', space=vmem, size = 0x12000, scoped, tag = 'internal scratch']
  #allocation2 [shape = 'f32[1,1]{1,0:T(1,128)S(6)}', space=smem, size = 0x200, scoped, tag = 'scoped memory for tpu_custom_call.1']
  %s0 = inlined_call_operand.vmem [shape: f32[128,24], index: 0, kind: input, shape index: {}]
  %s1 = inlined_call_operand.vmem [shape: bf16[24,256], index: 1, kind: input, shape index: {}]
  %s2 = inlined_call_operand.vmem [shape: f32[1,256], index: 2, kind: input, shape index: {}]
  %s3 = inlined_call_operand.hbm [shape: bf16[256,256], index: 3, kind: input, shape index: {}]
  %s4 = inlined_call_operand.vmem [shape: f32[1,256], index: 4, kind: input, shape index: {}]
  %s5 = inlined_call_operand.vmem [shape: bf16[256,128], index: 5, kind: input, shape index: {}]
  %s6 = inlined_call_operand.<no memory space> [shape: f32[1,1], index: 6, kind: input, shape index: {}]
  %s7 = inlined_call_operand.hbm [shape: f32[128,128], index: 7, kind: output, shape index: {}]
  %s8 = sld [smem:[#allocation0]]
  $region42: #{tpu_custom_call.1} parent=0
    _
  %s10 = ssub.s32 1, %s8
  %s11 = scalar_select 0, %s10, %s8
  %12 = sst [smem:[#allocation2]] %s6
  $region1: #{tpu_custom_call.1} parent=0
    #allocation3 [shape = 'u8[131072]{0}', space=vmem, size = 0x20000, scoped, tag = 'input window, operand 3, single buffered']
    #allocation4 [shape = 's32[1]{0}', space=sflag, size = 0x4, scoped, tag = 'scoped memory for tpu_custom_call.1']
    #allocation5 [shape = 's32[1]{0}', space=sflag, size = 0x4, scoped, tag = 'scoped memory for tpu_custom_call.1']
    #allocation6 [shape = 'u8[65536]{0}', space=vmem, size = 0x10000, scoped, tag = 'output window, operand 0, single buffered']
    %13 = vsyncpa [#allocation4], 0
    %14 = vsyncpa [#allocation5], 0
    // Predicated region
    $region2: #{tpu_custom_call.1} parent=1 // pred_check
      _
    $region3: #{tpu_custom_call.1} parent=1 // pred_check_branch
      %16 = sbr.rel (0) target = $region5
    $region4: #{tpu_custom_call.1} parent=1 // pred_region
      _
    $region5: #{tpu_custom_call.1} parent=1 // pred_fallthru
      _
    // Predicated region
    $region6: #{tpu_custom_call.1} parent=1 // pred_check
      _
    $region7: #{tpu_custom_call.1} parent=1 // pred_check_branch
      %18 = sbr.rel (0) target = $region9
    $region8: #{tpu_custom_call.1} parent=1 // pred_region
      _
    $region9: #{tpu_custom_call.1} parent=1 // pred_fallthru
      _
    // Predicated region
    $region10: #{tpu_custom_call.1} parent=1 // pred_check
      _
    $region11: #{tpu_custom_call.1} parent=1 // pred_check_branch
      %20 = sbr.rel (0) target = $region13
    $region12: #{tpu_custom_call.1} parent=1 // pred_region
      _
    $region13: #{tpu_custom_call.1} parent=1 // pred_fallthru
      _
    // Predicated region
    $region14: #{tpu_custom_call.1} parent=1 // pred_check
      _
    $region15: #{tpu_custom_call.1} parent=1 // pred_check_branch
      %22 = sbr.rel (0) target = $region17
    $region16: #{tpu_custom_call.1} parent=1 // pred_region
      %s24 = ssub.s32 4096, 4096
      %25 = vsyncadd [#allocation4], %s24
      %s26 = sshll.u32 [#allocation3], 4
      %s27 = int_to_ptr.vmem [resolvable:$true] %s26
      %32 = dma.hbm_to_vmem [thread:$0]  %s3, 4096, %s27, [#allocation4], 128, 128, 8
    $region17: #{tpu_custom_call.1} parent=1 // pred_fallthru
      _
    // Predicated region
    $region18: #{tpu_custom_call.1} parent=1 // pred_check
      _
    $region19: #{tpu_custom_call.1} parent=1 // pred_check_branch
      %34 = sbr.rel (0) target = $region21
    $region20: #{tpu_custom_call.1} parent=1 // pred_region
      _
    $region21: #{tpu_custom_call.1} parent=1 // pred_fallthru
      _
    // Predicated region
    $region22: #{tpu_custom_call.1} parent=1 // pred_check
      _
    $region23: #{tpu_custom_call.1} parent=1 // pred_check_branch
      %36 = sbr.rel (0) target = $region25
    $region24: #{tpu_custom_call.1} parent=1 // pred_region
      _
    $region25: #{tpu_custom_call.1} parent=1 // pred_fallthru
      _
    // Predicated region
    $region26: #{tpu_custom_call.1} parent=1 // pred_check
      _
    $region27: #{tpu_custom_call.1} parent=1 // pred_check_branch
      %38 = sbr.rel (0) target = $region29
    $region28: #{tpu_custom_call.1} parent=1 // pred_region
      _
    $region29: #{tpu_custom_call.1} parent=1 // pred_fallthru
      _
    // Predicated region
    $region30: #{tpu_custom_call.1} parent=1 // pred_check
      _
    $region31: #{tpu_custom_call.1} parent=1 // pred_check_branch
      %40 = sbr.rel (0) target = $region33
    $region32: #{tpu_custom_call.1} parent=1 // pred_region
      %41 = dma.done [#allocation4], 4096
    $region33: #{tpu_custom_call.1} parent=1 // pred_fallthru
      _
    %v43 = vld [vmem:[%s0] sm:$0xff]
    %v44 = vld [vmem:[%s0 + $0x8] sm:$0xff]
    %v45 = vld [vmem:[%s0 + $0x10] sm:$0xff]
    %v46 = vld [vmem:[%s0 + $0x18] sm:$0xff]
    %v47 = vld [vmem:[%s0 + $0x20] sm:$0xff]
    %v48 = vld [vmem:[%s0 + $0x28] sm:$0xff]
    %v49 = vld [vmem:[%s0 + $0x30] sm:$0xff]
    %v50 = vld [vmem:[%s0 + $0x38] sm:$0xff]
    %v51 = vld [vmem:[%s0 + $0x40] sm:$0xff]
    %v52 = vld [vmem:[%s0 + $0x48] sm:$0xff]
    %v53 = vld [vmem:[%s0 + $0x50] sm:$0xff]
    %v54 = vld [vmem:[%s0 + $0x58] sm:$0xff]
    %v55 = vld [vmem:[%s0 + $0x60] sm:$0xff]
    %v56 = vld [vmem:[%s0 + $0x68] sm:$0xff]
    %v57 = vld [vmem:[%s0 + $0x70] sm:$0xff]
    %v58 = vld [vmem:[%s0 + $0x78] sm:$0xff]
    %v59 = vpack.c.bf16 %v44, %v43
    %v60 = vpack.c.bf16 %v46, %v45
    %v61 = vpack.c.bf16 %v48, %v47
    %v62 = vpack.c.bf16 %v50, %v49
    %v63 = vpack.c.bf16 %v52, %v51
    %v64 = vpack.c.bf16 %v54, %v53
    %v65 = vpack.c.bf16 %v56, %v55
    %v66 = vpack.c.bf16 %v58, %v57
    %v67 = vld [vmem:[%s1] sm:$0xff]
    %v68 = vld [vmem:[%s1 + $0x8] sm:$0xff]
    %v69 = vld [vmem:[%s1 + $0x10] sm:$0xff]
    %v70 = vld [vmem:[%s2] sm:$0x3]
    %v72 = vlaneseq
    %v73 = vshrl.u32 %v72, 7
    %v74 = vsub.s32 0, %v73
    %v75 = vrot.slane %v70, %v74
    %v76 = vlaneseq
    %v77 = vshrl.u32 %v76, 7
    %v78 = vsub.s32 1, %v77
    %v79 = vrot.slane %v70, %v78
    %v85 = vunpack.c.l.b16 %v67
    %v86 = vunpack.c.h.b16 %v67
    %v87 = vunpack.c.l.b16 %v68
    %v88 = vunpack.c.h.b16 %v68
    %v89 = vunpack.c.l.b16 %v69
    %v90 = vunpack.c.h.b16 %v69
    %v91 = vpack.c.b16 %v87, %v85
    %v92 = vpack.c.b16 %v88, %v86
    %v93 = vpack.c.b16 %v89, %v89
    %v94 = vpack.c.b16 %v90, %v90
    %vm97 = vcmask 195584
    %v99 = vsel %vm97, %v59, 0
    %v102 = vsel %vm97, %v60, 0
    %v105 = vsel %vm97, %v61, 0
    %v108 = vsel %vm97, %v62, 0
    %v111 = vsel %vm97, %v63, 0
    %v114 = vsel %vm97, %v64, 0
    %v117 = vsel %vm97, %v65, 0
    %v120 = vsel %vm97, %v66, 0
    %vm122 = vcmask 1043456
    %v124 = vsel %vm122, %v93, 0
    %v127 = vsel %vm122, %v94, 0
    %129 = vmatprep.subr.bf16.mxu0 %v92
    %130 = vmatpush1.bf16.msra.mxu0 %v91
    %131 = vmatprep.subr.bf16.mxu0 %v127
    %132 = vmatpush1.bf16.msra.mxu0 %v124
    %133 = vmatprep.subr.bf16.mxu0 0
    %134 = vmatpush1.bf16.msra.mxu0 0
    %135 = vmatprep.subr.bf16.mxu0 0
    %136 = vmatpush1.bf16.msra.mxu0 0
    %137 = vmatprep.subr.bf16.mxu0 0
    %138 = vmatpush1.bf16.msra.mxu0 0
    %139 = vmatprep.subr.bf16.mxu0 0
    %140 = vmatpush1.bf16.msra.mxu0 0
    %141 = vmatprep.subr.bf16.mxu0 0
    %142 = vmatpush1.bf16.msra.mxu0 0
    %143 = vmatprep.subr.bf16.mxu0 0
    %144 = vmatpush1.bf16.msra.mxu0 0
    %145 = vmatprep.subr.bf16.mxu0 0
    %146 = vmatpush1.bf16.msra.mxu0 0
    %147 = vmatprep.subr.bf16.mxu0 0
    %148 = vmatpush1.bf16.msra.mxu0 0
    %149 = vmatprep.subr.bf16.mxu0 0
    %150 = vmatpush1.bf16.msra.mxu0 0
    %151 = vmatprep.subr.bf16.mxu0 0
    %152 = vmatpush1.bf16.msra.mxu0 0
    %153 = vmatprep.subr.bf16.mxu0 0
    %154 = vmatpush1.bf16.msra.mxu0 0
    %155 = vmatprep.subr.bf16.mxu0 0
    %156 = vmatpush1.bf16.msra.mxu0 0
    %157 = vmatprep.subr.bf16.mxu0 0
    %158 = vmatpush1.bf16.msra.mxu0 0
    %159 = vmatprep.subr.bf16.mxu0 0
    %160 = vmatpush1.bf16.msra.mxu0 0
    %161 = vmatprep.mubr.bf16.mxu0 0
    %162 = vmatmul.mubr.bf16.gmra.mrb[0].mxu0 %v99
    %v163 = vpop.f32.mrb[0].mxu0
    %v164 = vadd.f32 %v75, %v163
    %v165 = vpop.f32.mrb[0].mxu0
    %v166 = vadd.f32 %v79, %v165
    %v167 = vpop.f32.mrb[0].mxu0
    %v168 = vadd.f32 %v75, %v167
    %v169 = vpop.f32.mrb[0].mxu0
    %v170 = vadd.f32 %v79, %v169
    %171 = vmatprep.mubr.bf16.mxu0 0
    %172 = vmatmul.mubr.bf16.gmra.mrb[0].mxu0 %v102
    %v173 = vpop.f32.mrb[0].mxu0
    %v174 = vadd.f32 %v75, %v173
    %v175 = vpop.f32.mrb[0].mxu0
    %v176 = vadd.f32 %v79, %v175
    %v177 = vpop.f32.mrb[0].mxu0
    %v178 = vadd.f32 %v75, %v177
    %v179 = vpop.f32.mrb[0].mxu0
    %v180 = vadd.f32 %v79, %v179
    %181 = vmatprep.mubr.bf16.mxu0 0
    %182 = vmatmul.mubr.bf16.gmra.mrb[0].mxu0 %v105
    %v183 = vpop.f32.mrb[0].mxu0
    %v184 = vadd.f32 %v75, %v183
    %v185 = vpop.f32.mrb[0].mxu0
    %v186 = vadd.f32 %v79, %v185
    %v187 = vpop.f32.mrb[0].mxu0
    %v188 = vadd.f32 %v75, %v187
    %v189 = vpop.f32.mrb[0].mxu0
    %v190 = vadd.f32 %v79, %v189
    %191 = vmatprep.mubr.bf16.mxu0 0
    %192 = vmatmul.mubr.bf16.gmra.mrb[0].mxu0 %v108
    %v193 = vpop.f32.mrb[0].mxu0
    %v194 = vadd.f32 %v75, %v193
    %v195 = vpop.f32.mrb[0].mxu0
    %v196 = vadd.f32 %v79, %v195
    %v197 = vpop.f32.mrb[0].mxu0
    %v198 = vadd.f32 %v75, %v197
    %v199 = vpop.f32.mrb[0].mxu0
    %v200 = vadd.f32 %v79, %v199
    %201 = vmatprep.mubr.bf16.mxu0 0
    %202 = vmatmul.mubr.bf16.gmra.mrb[0].mxu0 %v111
    %v203 = vpop.f32.mrb[0].mxu0
    %v204 = vadd.f32 %v75, %v203
    %v205 = vpop.f32.mrb[0].mxu0
    %v206 = vadd.f32 %v79, %v205
    %v207 = vpop.f32.mrb[0].mxu0
    %v208 = vadd.f32 %v75, %v207
    %v209 = vpop.f32.mrb[0].mxu0
    %v210 = vadd.f32 %v79, %v209
    %211 = vmatprep.mubr.bf16.mxu0 0
    %212 = vmatmul.mubr.bf16.gmra.mrb[0].mxu0 %v114
    %v213 = vpop.f32.mrb[0].mxu0
    %v214 = vadd.f32 %v75, %v213
    %v215 = vpop.f32.mrb[0].mxu0
    %v216 = vadd.f32 %v79, %v215
    %v217 = vpop.f32.mrb[0].mxu0
    %v218 = vadd.f32 %v75, %v217
    %v219 = vpop.f32.mrb[0].mxu0
    %v220 = vadd.f32 %v79, %v219
    %221 = vmatprep.mubr.bf16.mxu0 0
    %222 = vmatmul.mubr.bf16.gmra.mrb[0].mxu0 %v117
    %v223 = vpop.f32.mrb[0].mxu0
    %v224 = vadd.f32 %v75, %v223
    %v225 = vpop.f32.mrb[0].mxu0
    %v226 = vadd.f32 %v79, %v225
    %v227 = vpop.f32.mrb[0].mxu0
    %v228 = vadd.f32 %v75, %v227
    %v229 = vpop.f32.mrb[0].mxu0
    %v230 = vadd.f32 %v79, %v229
    %231 = vmatprep.mubr.bf16.mxu0 0
    %232 = vmatmul.mubr.bf16.gmra.mrb[0].mxu0 %v120
    %v233 = vpop.f32.mrb[0].mxu0
    %v234 = vadd.f32 %v75, %v233
    %v235 = vpop.f32.mrb[0].mxu0
    %v236 = vadd.f32 %v79, %v235
    %v237 = vpop.f32.mrb[0].mxu0
    %v238 = vadd.f32 %v75, %v237
    %v239 = vpop.f32.mrb[0].mxu0
    %v240 = vadd.f32 %v79, %v239
    %241 = vdwg.mxu0
    %v242 = vmax.f32 %v164, 0.0
    %v243 = vmax.f32 %v166, 0.0
    %v244 = vmax.f32 %v168, 0.0
    %v245 = vmax.f32 %v170, 0.0
    %v246 = vmax.f32 %v174, 0.0
    %v247 = vmax.f32 %v176, 0.0
    %v248 = vmax.f32 %v178, 0.0
    %v249 = vmax.f32 %v180, 0.0
    %v250 = vmax.f32 %v184, 0.0
    %v251 = vmax.f32 %v186, 0.0
    %v252 = vmax.f32 %v188, 0.0
    %v253 = vmax.f32 %v190, 0.0
    %v254 = vmax.f32 %v194, 0.0
    %v255 = vmax.f32 %v196, 0.0
    %v256 = vmax.f32 %v198, 0.0
    %v257 = vmax.f32 %v200, 0.0
    %v258 = vmax.f32 %v204, 0.0
    %v259 = vmax.f32 %v206, 0.0
    %v260 = vmax.f32 %v208, 0.0
    %v261 = vmax.f32 %v210, 0.0
    %v262 = vmax.f32 %v214, 0.0
    %v263 = vmax.f32 %v216, 0.0
    %v264 = vmax.f32 %v218, 0.0
    %v265 = vmax.f32 %v220, 0.0
    %v266 = vmax.f32 %v224, 0.0
    %v267 = vmax.f32 %v226, 0.0
    %v268 = vmax.f32 %v228, 0.0
    %v269 = vmax.f32 %v230, 0.0
    %v270 = vmax.f32 %v234, 0.0
    %v271 = vmax.f32 %v236, 0.0
    %v272 = vmax.f32 %v238, 0.0
    %v273 = vmax.f32 %v240, 0.0
    %v274 = vpack.c.bf16 %v244, %v242
    %v275 = vpack.c.bf16 %v245, %v243
    %v276 = vpack.c.bf16 %v248, %v246
    %v277 = vpack.c.bf16 %v249, %v247
    %v278 = vpack.c.bf16 %v252, %v250
    %v279 = vpack.c.bf16 %v253, %v251
    %v280 = vpack.c.bf16 %v256, %v254
    %v281 = vpack.c.bf16 %v257, %v255
    %v282 = vpack.c.bf16 %v260, %v258
    %v283 = vpack.c.bf16 %v261, %v259
    %v284 = vpack.c.bf16 %v264, %v262
    %v285 = vpack.c.bf16 %v265, %v263
    %v286 = vpack.c.bf16 %v268, %v266
    %v287 = vpack.c.bf16 %v269, %v267
    %v288 = vpack.c.bf16 %v272, %v270
    %v289 = vpack.c.bf16 %v273, %v271
    %v290 = vld [vmem:[#allocation3] sm:$0xff]
    %v291 = vld [vmem:[#allocation3 + $0x8] sm:$0xff]
    %v292 = vld [vmem:[#allocation3 + $0x10] sm:$0xff]
    %v293 = vld [vmem:[#allocation3 + $0x18] sm:$0xff]
    %v294 = vld [vmem:[#allocation3 + $0x20] sm:$0xff]
    %v295 = vld [vmem:[#allocation3 + $0x28] sm:$0xff]
    %v296 = vld [vmem:[#allocation3 + $0x30] sm:$0xff]
    %v297 = vld [vmem:[#allocation3 + $0x38] sm:$0xff]
    %v298 = vld [vmem:[#allocation3 + $0x40] sm:$0xff]
    %v299 = vld [vmem:[#allocation3 + $0x48] sm:$0xff]
    %v300 = vld [vmem:[#allocation3 + $0x50] sm:$0xff]
    %v301 = vld [vmem:[#allocation3 + $0x58] sm:$0xff]
    %v302 = vld [vmem:[#allocation3 + $0x60] sm:$0xff]
    %v303 = vld [vmem:[#allocation3 + $0x68] sm:$0xff]
    %v304 = vld [vmem:[#allocation3 + $0x70] sm:$0xff]
    %v305 = vld [vmem:[#allocation3 + $0x78] sm:$0xff]
    %v306 = vld [vmem:[#allocation3 + $0x80] sm:$0xff]
    %v307 = vld [vmem:[#allocation3 + $0x88] sm:$0xff]
    %v308 = vld [vmem:[#allocation3 + $0x90] sm:$0xff]
    %v309 = vld [vmem:[#allocation3 + $0x98] sm:$0xff]
    %v310 = vld [vmem:[#allocation3 + $0xa0] sm:$0xff]
    %v311 = vld [vmem:[#allocation3 + $0xa8] sm:$0xff]
    %v312 = vld [vmem:[#allocation3 + $0xb0] sm:$0xff]
    %v313 = vld [vmem:[#allocation3 + $0xb8] sm:$0xff]
    %v314 = vld [vmem:[#allocation3 + $0xc0] sm:$0xff]
    %v315 = vld [vmem:[#allocation3 + $0xc8] sm:$0xff]
    %v316 = vld [vmem:[#allocation3 + $0xd0] sm:$0xff]
    %v317 = vld [vmem:[#allocation3 + $0xd8] sm:$0xff]
    %v318 = vld [vmem:[#allocation3 + $0xe0] sm:$0xff]
    %v319 = vld [vmem:[#allocation3 + $0xe8] sm:$0xff]
    %v320 = vld [vmem:[#allocation3 + $0xf0] sm:$0xff]
    %v321 = vld [vmem:[#allocation3 + $0xf8] sm:$0xff]
    %v322 = vld [vmem:[%s4] sm:$0x3]
    %v324 = vlaneseq
    %v325 = vshrl.u32 %v324, 7
    %v326 = vsub.s32 0, %v325
    %v327 = vrot.slane %v322, %v326
    %v328 = vlaneseq
    %v329 = vshrl.u32 %v328, 7
    %v330 = vsub.s32 1, %v329
    %v331 = vrot.slane %v322, %v330
    %v366 = vunpack.c.l.b16 %v290
    %v367 = vunpack.c.h.b16 %v290
    %v368 = vunpack.c.l.b16 %v291
    %v369 = vunpack.c.h.b16 %v291
    %v370 = vunpack.c.l.b16 %v292
    %v371 = vunpack.c.h.b16 %v292
    %v372 = vunpack.c.l.b16 %v293
    %v373 = vunpack.c.h.b16 %v293
    %v374 = vunpack.c.l.b16 %v294
    %v375 = vunpack.c.h.b16 %v294
    %v376 = vunpack.c.l.b16 %v295
    %v377 = vunpack.c.h.b16 %v295
    %v378 = vunpack.c.l.b16 %v296
    %v379 = vunpack.c.h.b16 %v296
    %v380 = vunpack.c.l.b16 %v297
    %v381 = vunpack.c.h.b16 %v297
    %v382 = vunpack.c.l.b16 %v298
    %v383 = vunpack.c.h.b16 %v298
    %v384 = vunpack.c.l.b16 %v299
    %v385 = vunpack.c.h.b16 %v299
    %v386 = vunpack.c.l.b16 %v300
    %v387 = vunpack.c.h.b16 %v300
    %v388 = vunpack.c.l.b16 %v301
    %v389 = vunpack.c.h.b16 %v301
    %v390 = vunpack.c.l.b16 %v302
    %v391 = vunpack.c.h.b16 %v302
    %v392 = vunpack.c.l.b16 %v303
    %v393 = vunpack.c.h.b16 %v303
    %v394 = vunpack.c.l.b16 %v304
    %v395 = vunpack.c.h.b16 %v304
    %v396 = vunpack.c.l.b16 %v305
    %v397 = vunpack.c.h.b16 %v305
    %v398 = vunpack.c.l.b16 %v306
    %v399 = vunpack.c.h.b16 %v306
    %v400 = vunpack.c.l.b16 %v307
    %v401 = vunpack.c.h.b16 %v307
    %v402 = vunpack.c.l.b16 %v308
    %v403 = vunpack.c.h.b16 %v308
    %v404 = vunpack.c.l.b16 %v309
    %v405 = vunpack.c.h.b16 %v309
    %v406 = vunpack.c.l.b16 %v310
    %v407 = vunpack.c.h.b16 %v310
    %v408 = vunpack.c.l.b16 %v311
    %v409 = vunpack.c.h.b16 %v311
    %v410 = vunpack.c.l.b16 %v312
    %v411 = vunpack.c.h.b16 %v312
    %v412 = vunpack.c.l.b16 %v313
    %v413 = vunpack.c.h.b16 %v313
    %v414 = vunpack.c.l.b16 %v314
    %v415 = vunpack.c.h.b16 %v314
    %v416 = vunpack.c.l.b16 %v315
    %v417 = vunpack.c.h.b16 %v315
    %v418 = vunpack.c.l.b16 %v316
    %v419 = vunpack.c.h.b16 %v316
    %v420 = vunpack.c.l.b16 %v317
    %v421 = vunpack.c.h.b16 %v317
    %v422 = vunpack.c.l.b16 %v318
    %v423 = vunpack.c.h.b16 %v318
    %v424 = vunpack.c.l.b16 %v319
    %v425 = vunpack.c.h.b16 %v319
    %v426 = vunpack.c.l.b16 %v320
    %v427 = vunpack.c.h.b16 %v320
    %v428 = vunpack.c.l.b16 %v321
    %v429 = vunpack.c.h.b16 %v321
    %v430 = vpack.c.b16 %v368, %v366
    %v431 = vpack.c.b16 %v369, %v367
    %v432 = vpack.c.b16 %v372, %v370
    %v433 = vpack.c.b16 %v373, %v371
    %v434 = vpack.c.b16 %v376, %v374
    %v435 = vpack.c.b16 %v377, %v375
    %v436 = vpack.c.b16 %v380, %v378
    %v437 = vpack.c.b16 %v381, %v379
    %v438 = vpack.c.b16 %v384, %v382
    %v439 = vpack.c.b16 %v385, %v383
    %v440 = vpack.c.b16 %v388, %v386
    %v441 = vpack.c.b16 %v389, %v387
    %v442 = vpack.c.b16 %v392, %v390
    %v443 = vpack.c.b16 %v393, %v391
    %v444 = vpack.c.b16 %v396, %v394
    %v445 = vpack.c.b16 %v397, %v395
    %v446 = vpack.c.b16 %v400, %v398
    %v447 = vpack.c.b16 %v401, %v399
    %v448 = vpack.c.b16 %v404, %v402
    %v449 = vpack.c.b16 %v405, %v403
    %v450 = vpack.c.b16 %v408, %v406
    %v451 = vpack.c.b16 %v409, %v407
    %v452 = vpack.c.b16 %v412, %v410
    %v453 = vpack.c.b16 %v413, %v411
    %v454 = vpack.c.b16 %v416, %v414
    %v455 = vpack.c.b16 %v417, %v415
    %v456 = vpack.c.b16 %v420, %v418
    %v457 = vpack.c.b16 %v421, %v419
    %v458 = vpack.c.b16 %v424, %v422
    %v459 = vpack.c.b16 %v425, %v423
    %v460 = vpack.c.b16 %v428, %v426
    %v461 = vpack.c.b16 %v429, %v427
    %494 = vmatprep.subr.bf16.mxu0 %v431
    %495 = vmatpush1.bf16.msra.mxu0 %v430
    %496 = vmatprep.subr.bf16.mxu0 %v433
    %497 = vmatpush1.bf16.msra.mxu0 %v432
    %498 = vmatprep.subr.bf16.mxu0 %v435
    %499 = vmatpush1.bf16.msra.mxu0 %v434
    %500 = vmatprep.subr.bf16.mxu0 %v437
    %501 = vmatpush1.bf16.msra.mxu0 %v436
    %502 = vmatprep.subr.bf16.mxu0 %v439
    %503 = vmatpush1.bf16.msra.mxu0 %v438
    %504 = vmatprep.subr.bf16.mxu0 %v441
    %505 = vmatpush1.bf16.msra.mxu0 %v440
    %506 = vmatprep.subr.bf16.mxu0 %v443
    %507 = vmatpush1.bf16.msra.mxu0 %v442
    %508 = vmatprep.subr.bf16.mxu0 %v445
    %509 = vmatpush1.bf16.msra.mxu0 %v444
    %510 = vmatprep.subr.bf16.mxu0 %v447
    %511 = vmatpush1.bf16.msra.mxu0 %v446
    %512 = vmatprep.subr.bf16.mxu0 %v449
    %513 = vmatpush1.bf16.msra.mxu0 %v448
    %514 = vmatprep.subr.bf16.mxu0 %v451
    %515 = vmatpush1.bf16.msra.mxu0 %v450
    %516 = vmatprep.subr.bf16.mxu0 %v453
    %517 = vmatpush1.bf16.msra.mxu0 %v452
    %518 = vmatprep.subr.bf16.mxu0 %v455
    %519 = vmatpush1.bf16.msra.mxu0 %v454
    %520 = vmatprep.subr.bf16.mxu0 %v457
    %521 = vmatpush1.bf16.msra.mxu0 %v456
    %522 = vmatprep.subr.bf16.mxu0 %v459
    %523 = vmatpush1.bf16.msra.mxu0 %v458
    %524 = vmatprep.subr.bf16.mxu0 %v461
    %525 = vmatpush1.bf16.msra.mxu0 %v460
    %526 = vmatprep.mubr.bf16.mxu0 %v275
    %527 = vmatmul.mubr.bf16.gmra.mrb[0].mxu0 %v274
    %v528 = vpop.f32.mrb[0].mxu0
    %v529 = vadd.f32 %v327, %v528
    %v530 = vpop.f32.mrb[0].mxu0
    %v531 = vadd.f32 %v331, %v530
    %v532 = vpop.f32.mrb[0].mxu0
    %v533 = vadd.f32 %v327, %v532
    %v534 = vpop.f32.mrb[0].mxu0
    %v535 = vadd.f32 %v331, %v534
    %536 = vmatprep.mubr.bf16.mxu0 %v277
    %537 = vmatmul.mubr.bf16.gmra.mrb[0].mxu0 %v276
    %v538 = vpop.f32.mrb[0].mxu0
    %v539 = vadd.f32 %v327, %v538
    %v540 = vpop.f32.mrb[0].mxu0
    %v541 = vadd.f32 %v331, %v540
    %v542 = vpop.f32.mrb[0].mxu0
    %v543 = vadd.f32 %v327, %v542
    %v544 = vpop.f32.mrb[0].mxu0
    %v545 = vadd.f32 %v331, %v544
    %546 = vmatprep.mubr.bf16.mxu0 %v279
    %547 = vmatmul.mubr.bf16.gmra.mrb[0].mxu0 %v278
    %v548 = vpop.f32.mrb[0].mxu0
    %v549 = vadd.f32 %v327, %v548
    %v550 = vpop.f32.mrb[0].mxu0
    %v551 = vadd.f32 %v331, %v550
    %v552 = vpop.f32.mrb[0].mxu0
    %v553 = vadd.f32 %v327, %v552
    %v554 = vpop.f32.mrb[0].mxu0
    %v555 = vadd.f32 %v331, %v554
    %556 = vmatprep.mubr.bf16.mxu0 %v281
    %557 = vmatmul.mubr.bf16.gmra.mrb[0].mxu0 %v280
    %v558 = vpop.f32.mrb[0].mxu0
    %v559 = vadd.f32 %v327, %v558
    %v560 = vpop.f32.mrb[0].mxu0
    %v561 = vadd.f32 %v331, %v560
    %v562 = vpop.f32.mrb[0].mxu0
    %v563 = vadd.f32 %v327, %v562
    %v564 = vpop.f32.mrb[0].mxu0
    %v565 = vadd.f32 %v331, %v564
    %566 = vmatprep.mubr.bf16.mxu0 %v283
    %567 = vmatmul.mubr.bf16.gmra.mrb[0].mxu0 %v282
    %v568 = vpop.f32.mrb[0].mxu0
    %v569 = vadd.f32 %v327, %v568
    %v570 = vpop.f32.mrb[0].mxu0
    %v571 = vadd.f32 %v331, %v570
    %v572 = vpop.f32.mrb[0].mxu0
    %v573 = vadd.f32 %v327, %v572
    %v574 = vpop.f32.mrb[0].mxu0
    %v575 = vadd.f32 %v331, %v574
    %576 = vmatprep.mubr.bf16.mxu0 %v285
    %577 = vmatmul.mubr.bf16.gmra.mrb[0].mxu0 %v284
    %v578 = vpop.f32.mrb[0].mxu0
    %v579 = vadd.f32 %v327, %v578
    %v580 = vpop.f32.mrb[0].mxu0
    %v581 = vadd.f32 %v331, %v580
    %v582 = vpop.f32.mrb[0].mxu0
    %v583 = vadd.f32 %v327, %v582
    %v584 = vpop.f32.mrb[0].mxu0
    %v585 = vadd.f32 %v331, %v584
    %586 = vmatprep.mubr.bf16.mxu0 %v287
    %587 = vmatmul.mubr.bf16.gmra.mrb[0].mxu0 %v286
    %v588 = vpop.f32.mrb[0].mxu0
    %v589 = vadd.f32 %v327, %v588
    %v590 = vpop.f32.mrb[0].mxu0
    %v591 = vadd.f32 %v331, %v590
    %v592 = vpop.f32.mrb[0].mxu0
    %v593 = vadd.f32 %v327, %v592
    %v594 = vpop.f32.mrb[0].mxu0
    %v595 = vadd.f32 %v331, %v594
    %596 = vmatprep.mubr.bf16.mxu0 %v289
    %597 = vmatmul.mubr.bf16.gmra.mrb[0].mxu0 %v288
    %v598 = vpop.f32.mrb[0].mxu0
    %v599 = vadd.f32 %v327, %v598
    %v600 = vpop.f32.mrb[0].mxu0
    %v601 = vadd.f32 %v331, %v600
    %v602 = vpop.f32.mrb[0].mxu0
    %v603 = vadd.f32 %v327, %v602
    %v604 = vpop.f32.mrb[0].mxu0
    %v605 = vadd.f32 %v331, %v604
    %606 = vdwg.mxu0
    %v607 = vmax.f32 %v529, 0.0
    %v608 = vmax.f32 %v531, 0.0
    %v609 = vmax.f32 %v533, 0.0
    %v610 = vmax.f32 %v535, 0.0
    %v611 = vmax.f32 %v539, 0.0
    %v612 = vmax.f32 %v541, 0.0
    %v613 = vmax.f32 %v543, 0.0
    %v614 = vmax.f32 %v545, 0.0
    %v615 = vmax.f32 %v549, 0.0
    %v616 = vmax.f32 %v551, 0.0
    %v617 = vmax.f32 %v553, 0.0
    %v618 = vmax.f32 %v555, 0.0
    %v619 = vmax.f32 %v559, 0.0
    %v620 = vmax.f32 %v561, 0.0
    %v621 = vmax.f32 %v563, 0.0
    %v622 = vmax.f32 %v565, 0.0
    %v623 = vmax.f32 %v569, 0.0
    %v624 = vmax.f32 %v571, 0.0
    %v625 = vmax.f32 %v573, 0.0
    %v626 = vmax.f32 %v575, 0.0
    %v627 = vmax.f32 %v579, 0.0
    %v628 = vmax.f32 %v581, 0.0
    %v629 = vmax.f32 %v583, 0.0
    %v630 = vmax.f32 %v585, 0.0
    %v631 = vmax.f32 %v589, 0.0
    %v632 = vmax.f32 %v591, 0.0
    %v633 = vmax.f32 %v593, 0.0
    %v634 = vmax.f32 %v595, 0.0
    %v635 = vmax.f32 %v599, 0.0
    %v636 = vmax.f32 %v601, 0.0
    %v637 = vmax.f32 %v603, 0.0
    %v638 = vmax.f32 %v605, 0.0
    %v639 = vpack.c.bf16 %v609, %v607
    %v640 = vpack.c.bf16 %v610, %v608
    %v641 = vpack.c.bf16 %v613, %v611
    %v642 = vpack.c.bf16 %v614, %v612
    %v643 = vpack.c.bf16 %v617, %v615
    %v644 = vpack.c.bf16 %v618, %v616
    %v645 = vpack.c.bf16 %v621, %v619
    %v646 = vpack.c.bf16 %v622, %v620
    %v647 = vpack.c.bf16 %v625, %v623
    %v648 = vpack.c.bf16 %v626, %v624
    %v649 = vpack.c.bf16 %v629, %v627
    %v650 = vpack.c.bf16 %v630, %v628
    %v651 = vpack.c.bf16 %v633, %v631
    %v652 = vpack.c.bf16 %v634, %v632
    %v653 = vpack.c.bf16 %v637, %v635
    %v654 = vpack.c.bf16 %v638, %v636
    %v655 = vld [vmem:[%s5] sm:$0xf]
    %v656 = vld [vmem:[%s5 + $0x4] sm:$0xf]
    %v657 = vld [vmem:[%s5 + $0x8] sm:$0xf]
    %v658 = vld [vmem:[%s5 + $0xc] sm:$0xf]
    %v659 = vld [vmem:[%s5 + $0x10] sm:$0xf]
    %v660 = vld [vmem:[%s5 + $0x14] sm:$0xf]
    %v661 = vld [vmem:[%s5 + $0x18] sm:$0xf]
    %v662 = vld [vmem:[%s5 + $0x1c] sm:$0xf]
    %v663 = vld [vmem:[%s5 + $0x20] sm:$0xf]
    %v664 = vld [vmem:[%s5 + $0x24] sm:$0xf]
    %v665 = vld [vmem:[%s5 + $0x28] sm:$0xf]
    %v666 = vld [vmem:[%s5 + $0x2c] sm:$0xf]
    %v667 = vld [vmem:[%s5 + $0x30] sm:$0xf]
    %v668 = vld [vmem:[%s5 + $0x34] sm:$0xf]
    %v669 = vld [vmem:[%s5 + $0x38] sm:$0xf]
    %v670 = vld [vmem:[%s5 + $0x3c] sm:$0xf]
    %v671 = vld [vmem:[%s5 + $0x40] sm:$0xf]
    %v672 = vld [vmem:[%s5 + $0x44] sm:$0xf]
    %v673 = vld [vmem:[%s5 + $0x48] sm:$0xf]
    %v674 = vld [vmem:[%s5 + $0x4c] sm:$0xf]
    %v675 = vld [vmem:[%s5 + $0x50] sm:$0xf]
    %v676 = vld [vmem:[%s5 + $0x54] sm:$0xf]
    %v677 = vld [vmem:[%s5 + $0x58] sm:$0xf]
    %v678 = vld [vmem:[%s5 + $0x5c] sm:$0xf]
    %v679 = vld [vmem:[%s5 + $0x60] sm:$0xf]
    %v680 = vld [vmem:[%s5 + $0x64] sm:$0xf]
    %v681 = vld [vmem:[%s5 + $0x68] sm:$0xf]
    %v682 = vld [vmem:[%s5 + $0x6c] sm:$0xf]
    %v683 = vld [vmem:[%s5 + $0x70] sm:$0xf]
    %v684 = vld [vmem:[%s5 + $0x74] sm:$0xf]
    %v685 = vld [vmem:[%s5 + $0x78] sm:$0xf]
    %v686 = vld [vmem:[%s5 + $0x7c] sm:$0xf]
    %s687 = sld [smem:[#allocation2]]
    %v688 = vstv %s687
    %v721 = vunpack.c.l.b16 %v655
    %v722 = vunpack.c.l.b16 %v656
    %v723 = vunpack.c.l.b16 %v657
    %v724 = vunpack.c.l.b16 %v658
    %v725 = vunpack.c.l.b16 %v659
    %v726 = vunpack.c.l.b16 %v660
    %v727 = vunpack.c.l.b16 %v661
    %v728 = vunpack.c.l.b16 %v662
    %v729 = vunpack.c.l.b16 %v663
    %v730 = vunpack.c.l.b16 %v664
    %v731 = vunpack.c.l.b16 %v665
    %v732 = vunpack.c.l.b16 %v666
    %v733 = vunpack.c.l.b16 %v667
    %v734 = vunpack.c.l.b16 %v668
    %v735 = vunpack.c.l.b16 %v669
    %v736 = vunpack.c.l.b16 %v670
    %v737 = vunpack.c.l.b16 %v671
    %v738 = vunpack.c.l.b16 %v672
    %v739 = vunpack.c.l.b16 %v673
    %v740 = vunpack.c.l.b16 %v674
    %v741 = vunpack.c.l.b16 %v675
    %v742 = vunpack.c.l.b16 %v676
    %v743 = vunpack.c.l.b16 %v677
    %v744 = vunpack.c.l.b16 %v678
    %v745 = vunpack.c.l.b16 %v679
    %v746 = vunpack.c.l.b16 %v680
    %v747 = vunpack.c.l.b16 %v681
    %v748 = vunpack.c.l.b16 %v682
    %v749 = vunpack.c.l.b16 %v683
    %v750 = vunpack.c.l.b16 %v684
    %v751 = vunpack.c.l.b16 %v685
    %v752 = vunpack.c.l.b16 %v686
    %v753 = vpack.c.b16 %v722, %v721
    %v754 = vpack.c.b16 %v724, %v723
    %v755 = vpack.c.b16 %v726, %v725
    %v756 = vpack.c.b16 %v728, %v727
    %v757 = vpack.c.b16 %v730, %v729
    %v758 = vpack.c.b16 %v732, %v731
    %v759 = vpack.c.b16 %v734, %v733
    %v760 = vpack.c.b16 %v736, %v735
    %v761 = vpack.c.b16 %v738, %v737
    %v762 = vpack.c.b16 %v740, %v739
    %v763 = vpack.c.b16 %v742, %v741
    %v764 = vpack.c.b16 %v744, %v743
    %v765 = vpack.c.b16 %v746, %v745
    %v766 = vpack.c.b16 %v748, %v747
    %v767 = vpack.c.b16 %v750, %v749
    %v768 = vpack.c.b16 %v752, %v751
    %785 = vmatprep.subr.bf16.mxu0 0
    %786 = vmatpush1.bf16.msra.mxu0 %v753
    %787 = vmatprep.subr.bf16.mxu0 0
    %788 = vmatpush1.bf16.msra.mxu0 %v754
    %789 = vmatprep.subr.bf16.mxu0 0
    %790 = vmatpush1.bf16.msra.mxu0 %v755
    %791 = vmatprep.subr.bf16.mxu0 0
    %792 = vmatpush1.bf16.msra.mxu0 %v756
    %793 = vmatprep.subr.bf16.mxu0 0
    %794 = vmatpush1.bf16.msra.mxu0 %v757
    %795 = vmatprep.subr.bf16.mxu0 0
    %796 = vmatpush1.bf16.msra.mxu0 %v758
    %797 = vmatprep.subr.bf16.mxu0 0
    %798 = vmatpush1.bf16.msra.mxu0 %v759
    %799 = vmatprep.subr.bf16.mxu0 0
    %800 = vmatpush1.bf16.msra.mxu0 %v760
    %801 = vmatprep.subr.bf16.mxu0 0
    %802 = vmatpush1.bf16.msra.mxu0 %v761
    %803 = vmatprep.subr.bf16.mxu0 0
    %804 = vmatpush1.bf16.msra.mxu0 %v762
    %805 = vmatprep.subr.bf16.mxu0 0
    %806 = vmatpush1.bf16.msra.mxu0 %v763
    %807 = vmatprep.subr.bf16.mxu0 0
    %808 = vmatpush1.bf16.msra.mxu0 %v764
    %809 = vmatprep.subr.bf16.mxu0 0
    %810 = vmatpush1.bf16.msra.mxu0 %v765
    %811 = vmatprep.subr.bf16.mxu0 0
    %812 = vmatpush1.bf16.msra.mxu0 %v766
    %813 = vmatprep.subr.bf16.mxu0 0
    %814 = vmatpush1.bf16.msra.mxu0 %v767
    %815 = vmatprep.subr.bf16.mxu0 0
    %816 = vmatpush1.bf16.msra.mxu0 %v768
    %817 = vmatprep.mubr.bf16.mxu0 %v640
    %818 = vmatmul.mubr.bf16.gmra.mrb[0].mxu0 %v639
    %v819 = vpop.f32.mrb[0].mxu0
    %v820 = vadd.f32 %v688, %v819
    %v821 = vpop.f32.mrb[0].mxu0
    %v822 = vpop.f32.mrb[0].mxu0
    %v823 = vadd.f32 %v688, %v822
    %v824 = vpop.f32.mrb[0].mxu0
    %825 = vmatprep.mubr.bf16.mxu0 %v642
    %826 = vmatmul.mubr.bf16.gmra.mrb[0].mxu0 %v641
    %v827 = vpop.f32.mrb[0].mxu0
    %v828 = vadd.f32 %v688, %v827
    %v829 = vpop.f32.mrb[0].mxu0
    %v830 = vpop.f32.mrb[0].mxu0
    %v831 = vadd.f32 %v688, %v830
    %v832 = vpop.f32.mrb[0].mxu0
    %833 = vmatprep.mubr.bf16.mxu0 %v644
    %834 = vmatmul.mubr.bf16.gmra.mrb[0].mxu0 %v643
    %v835 = vpop.f32.mrb[0].mxu0
    %v836 = vadd.f32 %v688, %v835
    %v837 = vpop.f32.mrb[0].mxu0
    %v838 = vpop.f32.mrb[0].mxu0
    %v839 = vadd.f32 %v688, %v838
    %v840 = vpop.f32.mrb[0].mxu0
    %841 = vmatprep.mubr.bf16.mxu0 %v646
    %842 = vmatmul.mubr.bf16.gmra.mrb[0].mxu0 %v645
    %v843 = vpop.f32.mrb[0].mxu0
    %v844 = vadd.f32 %v688, %v843
    %v845 = vpop.f32.mrb[0].mxu0
    %v846 = vpop.f32.mrb[0].mxu0
    %v847 = vadd.f32 %v688, %v846
    %v848 = vpop.f32.mrb[0].mxu0
    %849 = vmatprep.mubr.bf16.mxu0 %v648
    %850 = vmatmul.mubr.bf16.gmra.mrb[0].mxu0 %v647
    %v851 = vpop.f32.mrb[0].mxu0
    %v852 = vadd.f32 %v688, %v851
    %v853 = vpop.f32.mrb[0].mxu0
    %v854 = vpop.f32.mrb[0].mxu0
    %v855 = vadd.f32 %v688, %v854
    %v856 = vpop.f32.mrb[0].mxu0
    %857 = vmatprep.mubr.bf16.mxu0 %v650
    %858 = vmatmul.mubr.bf16.gmra.mrb[0].mxu0 %v649
    %v859 = vpop.f32.mrb[0].mxu0
    %v860 = vadd.f32 %v688, %v859
    %v861 = vpop.f32.mrb[0].mxu0
    %v862 = vpop.f32.mrb[0].mxu0
    %v863 = vadd.f32 %v688, %v862
    %v864 = vpop.f32.mrb[0].mxu0
    %865 = vmatprep.mubr.bf16.mxu0 %v652
    %866 = vmatmul.mubr.bf16.gmra.mrb[0].mxu0 %v651
    %v867 = vpop.f32.mrb[0].mxu0
    %v868 = vadd.f32 %v688, %v867
    %v869 = vpop.f32.mrb[0].mxu0
    %v870 = vpop.f32.mrb[0].mxu0
    %v871 = vadd.f32 %v688, %v870
    %v872 = vpop.f32.mrb[0].mxu0
    %873 = vmatprep.mubr.bf16.mxu0 %v654
    %874 = vmatmul.mubr.bf16.gmra.mrb[0].mxu0 %v653
    %v875 = vpop.f32.mrb[0].mxu0
    %v876 = vadd.f32 %v688, %v875
    %v877 = vpop.f32.mrb[0].mxu0
    %v878 = vpop.f32.mrb[0].mxu0
    %v879 = vadd.f32 %v688, %v878
    %v880 = vpop.f32.mrb[0].mxu0
    %881 = vdwg.mxu0
    %882 = vst [vmem:[#allocation6] sm:$0xff] %v820
    %883 = vst [vmem:[#allocation6 + $0x8] sm:$0xff] %v823
    %884 = vst [vmem:[#allocation6 + $0x10] sm:$0xff] %v828
    %885 = vst [vmem:[#allocation6 + $0x18] sm:$0xff] %v831
    %886 = vst [vmem:[#allocation6 + $0x20] sm:$0xff] %v836
    %887 = vst [vmem:[#allocation6 + $0x28] sm:$0xff] %v839
    %888 = vst [vmem:[#allocation6 + $0x30] sm:$0xff] %v844
    %889 = vst [vmem:[#allocation6 + $0x38] sm:$0xff] %v847
    %890 = vst [vmem:[#allocation6 + $0x40] sm:$0xff] %v852
    %891 = vst [vmem:[#allocation6 + $0x48] sm:$0xff] %v855
    %892 = vst [vmem:[#allocation6 + $0x50] sm:$0xff] %v860
    %893 = vst [vmem:[#allocation6 + $0x58] sm:$0xff] %v863
    %894 = vst [vmem:[#allocation6 + $0x60] sm:$0xff] %v868
    %895 = vst [vmem:[#allocation6 + $0x68] sm:$0xff] %v871
    %896 = vst [vmem:[#allocation6 + $0x70] sm:$0xff] %v876
    %897 = vst [vmem:[#allocation6 + $0x78] sm:$0xff] %v879
    // Predicated region
    $region34: #{tpu_custom_call.1} parent=1 // pred_check
      _
    $region35: #{tpu_custom_call.1} parent=1 // pred_check_branch
      %899 = sbr.rel (0) target = $region37
    $region36: #{tpu_custom_call.1} parent=1 // pred_region
      %s901 = ssub.s32 2048, 2048
      %902 = vsyncadd [#allocation5], %s901
      %s903 = sshll.u32 [#allocation6], 4
      %s904 = int_to_ptr.vmem [resolvable:$true] %s903
      %909 = dma.vmem_to_hbm [thread:$0]  %s904, 2048, %s7, [#allocation5], 128, 128, 8
    $region37: #{tpu_custom_call.1} parent=1 // pred_fallthru
      _
    // Predicated region
    $region38: #{tpu_custom_call.1} parent=1 // pred_check
      _
    $region39: #{tpu_custom_call.1} parent=1 // pred_check_branch
      %911 = sbr.rel (0) target = $region41
    $region40: #{tpu_custom_call.1} parent=1 // pred_region
      %912 = dma.done [#allocation5], 2048
    $region41: #{tpu_custom_call.1} parent=1 // pred_fallthru
      _
    %913 = vsyncpa [#allocation4], 1
    %914 = vsyncpa [#allocation5], 1

</llo_original>
